<compile_context>
chip_gen: v7x
topology: tpu7x:2x2x1
jax: 0.10.0
libtpu: 0.0.40
codegen_flags: <defaults>
</compile_context>

<pallas_src>
import jax
import jax.numpy as jnp
from jax.experimental import pallas as pl
from jax.experimental.pallas import tpu as pltpu

_EPS = 1e-6
_LANES = 128
_TILE_MIN = 1024        # 8 sublane-rows x 128 lanes of batch items
_TILE_MAX = 32768       # ~1.5 MiB of kernel HBM I/O per grid step


def _round_up(x: int, m: int) -> int:
    return ((x + m - 1) // m) * m


def _pick_tile(n: int) -> int:
    """Items per grid step: as large as useful, multiple of 1024, >=2 steps for big N."""
    n_eff = _round_up(max(n, 1), _TILE_MIN)
    if n_eff <= _TILE_MAX:
        return n_eff                                  # single step (small / medium N)
    if n_eff <= 2 * _TILE_MAX:
        return _round_up(n_eff // 2, _TILE_MIN)       # exactly two steps (v7x megacore)
    return _TILE_MAX


def _axis_angle_to_matrix_kernel(aa_ref, out_ref):
    # aa_ref : (3, R, 128) -- component-major (rx, ry, rz), batch packed on (row, lane)
    # out_ref: (9, R, 128) -- r00..r22 (row-major 3x3) in the same batch packing
    rx = aa_ref[0]
    ry = aa_ref[1]
    rz = aa_ref[2]

    theta2 = rx * rx + ry * ry + rz * rz
    theta = jnp.sqrt(theta2)
    inv = 1.0 / (theta + _EPS)      # exact divide: keeps parity with kornia/ceres numerics
    wx = rx * inv
    wy = ry * inv
    wz = rz * inv

    c = jnp.cos(theta)
    s = jnp.sin(theta)
    o = 1.0 - c

    wxy = wx * wy * o
    wxz = wx * wz * o
    wyz = wy * wz * o

    big = theta2 > _EPS
    one = jnp.ones_like(rx)

    # Rodrigues branch vs first-order Taylor (I + skew(aa)), selected per lane.
    out_ref[0] = jnp.where(big, c + wx * wx * o, one)
    out_ref[1] = jnp.where(big, wxy - wz * s, -rz)
    out_ref[2] = jnp.where(big, wxz + wy * s, ry)
    out_ref[3] = jnp.where(big, wxy + wz * s, rz)
    out_ref[4] = jnp.where(big, c + wy * wy * o, one)
    out_ref[5] = jnp.where(big, wyz - wx * s, -rx)
    out_ref[6] = jnp.where(big, wxz - wy * s, -ry)
    out_ref[7] = jnp.where(big, wyz + wx * s, rx)
    out_ref[8] = jnp.where(big, c + wz * wz * o, one)


@jax.jit
def axis_angle_to_rotation_matrix(angle_axis: jax.Array) -> jax.Array:
    """angle_axis: (N, 3) -> (N, 3, 3), matching kornia.axis_angle_to_rotation_matrix."""
    assert angle_axis.ndim == 2 and angle_axis.shape[1] == 3
    n = angle_axis.shape[0]
    if n == 0:
        return jnp.zeros((0, 3, 3), angle_axis.dtype)

    tile = _pick_tile(n)
    n_pad = _round_up(n, tile)
    rows = tile // _LANES                 # sublane-rows of batch items per block
    grid = (n_pad // tile,)

    # One fused XLA pass: cast + transpose + zero-pad to (3, n_pad).  Padded items are
    # all-zero -> Taylor branch -> identity matrices, sliced off at the end.
    aa_t = jnp.zeros((3, n_pad), jnp.float32).at[:, :n].set(
        angle_axis.astype(jnp.float32).T)
    # Free row-major relabeling of the batch axis into dense (row, lane) packing.
    aa_g = aa_t.reshape(3, n_pad // _LANES, _LANES)

    out_g = pl.pallas_call(
        _axis_angle_to_matrix_kernel,
        out_shape=jax.ShapeDtypeStruct((9, n_pad // _LANES, _LANES), jnp.float32),
        grid=grid,
        in_specs=[pl.BlockSpec((3, rows, _LANES), lambda i: (0, i, 0))],
        out_specs=pl.BlockSpec((9, rows, _LANES), lambda i: (0, i, 0)),
        compiler_params=pltpu.CompilerParams(dimension_semantics=("parallel",)),
    )(aa_g)

    # Free reshape back to (9, n_pad); one fused slice+transpose pass to (N, 3, 3).
    rot = out_g.reshape(9, n_pad)[:, :n].T.reshape(n, 3, 3)
    return rot.astype(angle_axis.dtype)


class AxisAngle:
    """JAX/Pallas port of moai AxisAngle (only to='mat' supported)."""

    def __init__(self, to: str = "mat"):
        if to != "mat":
            raise NotImplementedError("Only to='mat' implemented in Pallas port.")

    def __call__(self, angle_axis: jax.Array) -> jax.Array:
        return axis_angle_to_rotation_matrix(angle_axis)


def _reference(angle_axis):
    """Pure-JAX reference with identical kornia/ceres semantics (for verification)."""
    aa = angle_axis.astype(jnp.float32)
    rx, ry, rz = aa[:, 0:1], aa[:, 1:2], aa[:, 2:3]
    theta2 = rx * rx + ry * ry + rz * rz
    theta = jnp.sqrt(theta2)
    w = aa / (theta + _EPS)
    wx, wy, wz = w[:, 0:1], w[:, 1:2], w[:, 2:3]
    c, s = jnp.cos(theta), jnp.sin(theta)
    o = 1.0 - c
    normal = jnp.concatenate(
        [c + wx * wx * o, wx * wy * o - wz * s, wy * s + wx * wz * o,
         wz * s + wx * wy * o, c + wy * wy * o, -wx * s + wy * wz * o,
         -wy * s + wx * wz * o, wx * s + wy * wz * o, c + wz * wz * o], axis=1)
    one = jnp.ones_like(rx)
    taylor = jnp.concatenate(
        [one, -rz, ry, rz, one, -rx, -ry, rx, one], axis=1)
    return jnp.where(theta2 > _EPS, normal, taylor).reshape(-1, 3, 3)


if __name__ == "__main__":
    key = jax.random.PRNGKey(0)
    N = 16
    angle_axis = jax.random.normal(key, (N, 3), dtype=jnp.float32)
    # force a few rows into the small-angle (Taylor) branch
    angle_axis = angle_axis.at[0].set(jnp.array([1e-8, -2e-8, 3e-8], jnp.float32))
    angle_axis = angle_axis.at[1].set(jnp.zeros((3,), jnp.float32))

    module = AxisAngle(to="mat")
    rot = jax.block_until_ready(module(angle_axis))
    ref = _reference(angle_axis)
    assert rot.shape == (N, 3, 3)
    assert jnp.allclose(rot, ref, atol=1e-5, rtol=1e-5)

    # second, non-128-aligned batch size to exercise the padded tail path
    angle_axis2 = jax.random.normal(jax.random.PRNGKey(1), (257, 3), dtype=jnp.float32)
    rot2 = jax.block_until_ready(module(angle_axis2))
    assert rot2.shape == (257, 3, 3)
    assert jnp.allclose(rot2, _reference(angle_axis2), atol=1e-5, rtol=1e-5)

    print("KERNEL_OK")
</pallas_src>

<mosaic_0001>
module attributes {stable_mosaic.version = 11 : i64} {
  func.func @_axis_angle_to_matrix_kernel(%arg0: i32, %arg1: memref<3x8x128xf32, #tpu.memory_space<vmem>>, %arg2: memref<9x8x128xf32, #tpu.memory_space<vmem>>) attributes {dimension_semantics = [#tpu.dimension_semantics<parallel>], iteration_bounds = array<i64: 1>, scalar_prefetch = 0 : i64, scratch_operands = 0 : i64, tpu.core_type = #tpu.core_type<tc>, window_params = [{transform_indices = @transform_0, window_bounds = array<i64: 3, 8, 128>}, {transform_indices = @transform_1, window_bounds = array<i64: 9, 8, 128>}]} {
    %c0 = arith.constant 0 : index
    %c0_0 = arith.constant 0 : index
    %c0_1 = arith.constant 0 : index
    %0 = vector.load %arg1[%c0, %c0_0, %c0_1] : memref<3x8x128xf32, #tpu.memory_space<vmem>>, vector<1x8x128xf32>
    %1 = vector.shape_cast %0 : vector<1x8x128xf32> to vector<8x128xf32>
    %c1 = arith.constant 1 : index
    %c0_2 = arith.constant 0 : index
    %c0_3 = arith.constant 0 : index
    %2 = vector.load %arg1[%c1, %c0_2, %c0_3] : memref<3x8x128xf32, #tpu.memory_space<vmem>>, vector<1x8x128xf32>
    %3 = vector.shape_cast %2 : vector<1x8x128xf32> to vector<8x128xf32>
    %c2 = arith.constant 2 : index
    %c0_4 = arith.constant 0 : index
    %c0_5 = arith.constant 0 : index
    %4 = vector.load %arg1[%c2, %c0_4, %c0_5] : memref<3x8x128xf32, #tpu.memory_space<vmem>>, vector<1x8x128xf32>
    %5 = vector.shape_cast %4 : vector<1x8x128xf32> to vector<8x128xf32>
    %6 = arith.mulf %1, %1 : vector<8x128xf32>
    %7 = arith.mulf %3, %3 : vector<8x128xf32>
    %8 = arith.addf %6, %7 : vector<8x128xf32>
    %9 = arith.mulf %5, %5 : vector<8x128xf32>
    %10 = arith.addf %8, %9 : vector<8x128xf32>
    %11 = math.sqrt %10 : vector<8x128xf32>
    %cst = arith.constant 9.99999997E-7 : f32
    %12 = vector.broadcast %cst : f32 to vector<8x128xf32>
    %13 = arith.addf %11, %12 : vector<8x128xf32>
    %cst_6 = arith.constant 1.000000e+00 : f32
    %14 = vector.broadcast %cst_6 : f32 to vector<8x128xf32>
    %15 = arith.divf %14, %13 : vector<8x128xf32>
    %16 = arith.mulf %1, %15 : vector<8x128xf32>
    %17 = arith.mulf %3, %15 : vector<8x128xf32>
    %18 = arith.mulf %5, %15 : vector<8x128xf32>
    %19 = math.cos %11 : vector<8x128xf32>
    %20 = math.sin %11 : vector<8x128xf32>
    %cst_7 = arith.constant 1.000000e+00 : f32
    %21 = vector.broadcast %cst_7 : f32 to vector<8x128xf32>
    %22 = arith.subf %21, %19 : vector<8x128xf32>
    %23 = arith.mulf %16, %17 : vector<8x128xf32>
    %24 = arith.mulf %23, %22 : vector<8x128xf32>
    %25 = arith.mulf %16, %18 : vector<8x128xf32>
    %26 = arith.mulf %25, %22 : vector<8x128xf32>
    %27 = arith.mulf %17, %18 : vector<8x128xf32>
    %28 = arith.mulf %27, %22 : vector<8x128xf32>
    %cst_8 = arith.constant 9.99999997E-7 : f32
    %29 = vector.broadcast %cst_8 : f32 to vector<8x128xf32>
    %30 = arith.cmpf ogt, %10, %29 : vector<8x128xf32>
    %cst_9 = arith.constant 1.000000e+00 : f32
    %31 = vector.broadcast %cst_9 : f32 to vector<8x128xf32>
    %32 = arith.mulf %16, %16 : vector<8x128xf32>
    %33 = arith.mulf %32, %22 : vector<8x128xf32>
    %34 = arith.addf %19, %33 : vector<8x128xf32>
    %35 = arith.select %30, %34, %31 : vector<8x128xi1>, vector<8x128xf32>
    %c0_10 = arith.constant 0 : index
    %c0_11 = arith.constant 0 : index
    %c0_12 = arith.constant 0 : index
    %36 = vector.load %arg2[%c0_10, %c0_11, %c0_12] : memref<9x8x128xf32, #tpu.memory_space<vmem>>, vector<1x8x128xf32>
    %37 = vector.shape_cast %36 : vector<1x8x128xf32> to vector<8x128xf32>
    %38 = vector.shape_cast %35 : vector<8x128xf32> to vector<1x8x128xf32>
    tpu.vector_store %arg2[%c0_10, %c0_11, %c0_12], %38 {strides = array<i32>} : memref<9x8x128xf32, #tpu.memory_space<vmem>>, vector<1x8x128xf32>,
    %39 = arith.mulf %18, %20 : vector<8x128xf32>
    %40 = arith.subf %24, %39 : vector<8x128xf32>
    %cst_13 = arith.constant 0.000000e+00 : f32
    %41 = vector.broadcast %cst_13 : f32 to vector<8x128xf32>
    %42 = arith.subf %41, %5 : vector<8x128xf32>
    %43 = arith.select %30, %40, %42 : vector<8x128xi1>, vector<8x128xf32>
    %c1_14 = arith.constant 1 : index
    %c0_15 = arith.constant 0 : index
    %c0_16 = arith.constant 0 : index
    %44 = vector.load %arg2[%c1_14, %c0_15, %c0_16] : memref<9x8x128xf32, #tpu.memory_space<vmem>>, vector<1x8x128xf32>
    %45 = vector.shape_cast %44 : vector<1x8x128xf32> to vector<8x128xf32>
    %46 = vector.shape_cast %43 : vector<8x128xf32> to vector<1x8x128xf32>
    tpu.vector_store %arg2[%c1_14, %c0_15, %c0_16], %46 {strides = array<i32>} : memref<9x8x128xf32, #tpu.memory_space<vmem>>, vector<1x8x128xf32>,
    %47 = arith.mulf %17, %20 : vector<8x128xf32>
    %48 = arith.addf %26, %47 : vector<8x128xf32>
    %49 = arith.select %30, %48, %3 : vector<8x128xi1>, vector<8x128xf32>
    %c2_17 = arith.constant 2 : index
    %c0_18 = arith.constant 0 : index
    %c0_19 = arith.constant 0 : index
    %50 = vector.load %arg2[%c2_17, %c0_18, %c0_19] : memref<9x8x128xf32, #tpu.memory_space<vmem>>, vector<1x8x128xf32>
    %51 = vector.shape_cast %50 : vector<1x8x128xf32> to vector<8x128xf32>
    %52 = vector.shape_cast %49 : vector<8x128xf32> to vector<1x8x128xf32>
    tpu.vector_store %arg2[%c2_17, %c0_18, %c0_19], %52 {strides = array<i32>} : memref<9x8x128xf32, #tpu.memory_space<vmem>>, vector<1x8x128xf32>,
    %53 = arith.mulf %18, %20 : vector<8x128xf32>
    %54 = arith.addf %24, %53 : vector<8x128xf32>
    %55 = arith.select %30, %54, %5 : vector<8x128xi1>, vector<8x128xf32>
    %c3 = arith.constant 3 : index
    %c0_20 = arith.constant 0 : index
    %c0_21 = arith.constant 0 : index
    %56 = vector.load %arg2[%c3, %c0_20, %c0_21] : memref<9x8x128xf32, #tpu.memory_space<vmem>>, vector<1x8x128xf32>
    %57 = vector.shape_cast %56 : vector<1x8x128xf32> to vector<8x128xf32>
    %58 = vector.shape_cast %55 : vector<8x128xf32> to vector<1x8x128xf32>
    tpu.vector_store %arg2[%c3, %c0_20, %c0_21], %58 {strides = array<i32>} : memref<9x8x128xf32, #tpu.memory_space<vmem>>, vector<1x8x128xf32>,
    %59 = arith.mulf %17, %17 : vector<8x128xf32>
    %60 = arith.mulf %59, %22 : vector<8x128xf32>
    %61 = arith.addf %19, %60 : vector<8x128xf32>
    %62 = arith.select %30, %61, %31 : vector<8x128xi1>, vector<8x128xf32>
    %c4 = arith.constant 4 : index
    %c0_22 = arith.constant 0 : index
    %c0_23 = arith.constant 0 : index
    %63 = vector.load %arg2[%c4, %c0_22, %c0_23] : memref<9x8x128xf32, #tpu.memory_space<vmem>>, vector<1x8x128xf32>
    %64 = vector.shape_cast %63 : vector<1x8x128xf32> to vector<8x128xf32>
    %65 = vector.shape_cast %62 : vector<8x128xf32> to vector<1x8x128xf32>
    tpu.vector_store %arg2[%c4, %c0_22, %c0_23], %65 {strides = array<i32>} : memref<9x8x128xf32, #tpu.memory_space<vmem>>, vector<1x8x128xf32>,
    %66 = arith.mulf %16, %20 : vector<8x128xf32>
    %67 = arith.subf %28, %66 : vector<8x128xf32>
    %cst_24 = arith.constant 0.000000e+00 : f32
    %68 = vector.broadcast %cst_24 : f32 to vector<8x128xf32>
    %69 = arith.subf %68, %1 : vector<8x128xf32>
    %70 = arith.select %30, %67, %69 : vector<8x128xi1>, vector<8x128xf32>
    %c5 = arith.constant 5 : index
    %c0_25 = arith.constant 0 : index
    %c0_26 = arith.constant 0 : index
    %71 = vector.load %arg2[%c5, %c0_25, %c0_26] : memref<9x8x128xf32, #tpu.memory_space<vmem>>, vector<1x8x128xf32>
    %72 = vector.shape_cast %71 : vector<1x8x128xf32> to vector<8x128xf32>
    %73 = vector.shape_cast %70 : vector<8x128xf32> to vector<1x8x128xf32>
    tpu.vector_store %arg2[%c5, %c0_25, %c0_26], %73 {strides = array<i32>} : memref<9x8x128xf32, #tpu.memory_space<vmem>>, vector<1x8x128xf32>,
    %74 = arith.mulf %17, %20 : vector<8x128xf32>
    %75 = arith.subf %26, %74 : vector<8x128xf32>
    %cst_27 = arith.constant 0.000000e+00 : f32
    %76 = vector.broadcast %cst_27 : f32 to vector<8x128xf32>
    %77 = arith.subf %76, %3 : vector<8x128xf32>
    %78 = arith.select %30, %75, %77 : vector<8x128xi1>, vector<8x128xf32>
    %c6 = arith.constant 6 : index
    %c0_28 = arith.constant 0 : index
    %c0_29 = arith.constant 0 : index
    %79 = vector.load %arg2[%c6, %c0_28, %c0_29] : memref<9x8x128xf32, #tpu.memory_space<vmem>>, vector<1x8x128xf32>
    %80 = vector.shape_cast %79 : vector<1x8x128xf32> to vector<8x128xf32>
    %81 = vector.shape_cast %78 : vector<8x128xf32> to vector<1x8x128xf32>
    tpu.vector_store %arg2[%c6, %c0_28, %c0_29], %81 {strides = array<i32>} : memref<9x8x128xf32, #tpu.memory_space<vmem>>, vector<1x8x128xf32>,
    %82 = arith.mulf %16, %20 : vector<8x128xf32>
    %83 = arith.addf %28, %82 : vector<8x128xf32>
    %84 = arith.select %30, %83, %1 : vector<8x128xi1>, vector<8x128xf32>
    %c7 = arith.constant 7 : index
    %c0_30 = arith.constant 0 : index
    %c0_31 = arith.constant 0 : index
    %85 = vector.load %arg2[%c7, %c0_30, %c0_31] : memref<9x8x128xf32, #tpu.memory_space<vmem>>, vector<1x8x128xf32>
    %86 = vector.shape_cast %85 : vector<1x8x128xf32> to vector<8x128xf32>
    %87 = vector.shape_cast %84 : vector<8x128xf32> to vector<1x8x128xf32>
    tpu.vector_store %arg2[%c7, %c0_30, %c0_31], %87 {strides = array<i32>} : memref<9x8x128xf32, #tpu.memory_space<vmem>>, vector<1x8x128xf32>,
    %88 = arith.mulf %18, %18 : vector<8x128xf32>
    %89 = arith.mulf %88, %22 : vector<8x128xf32>
    %90 = arith.addf %19, %89 : vector<8x128xf32>
    %91 = arith.select %30, %90, %31 : vector<8x128xi1>, vector<8x128xf32>
    %c8 = arith.constant 8 : index
    %c0_32 = arith.constant 0 : index
    %c0_33 = arith.constant 0 : index
    %92 = vector.load %arg2[%c8, %c0_32, %c0_33] : memref<9x8x128xf32, #tpu.memory_space<vmem>>, vector<1x8x128xf32>
    %93 = vector.shape_cast %92 : vector<1x8x128xf32> to vector<8x128xf32>
    %94 = vector.shape_cast %91 : vector<8x128xf32> to vector<1x8x128xf32>
    tpu.vector_store %arg2[%c8, %c0_32, %c0_33], %94 {strides = array<i32>} : memref<9x8x128xf32, #tpu.memory_space<vmem>>, vector<1x8x128xf32>,
    return
  }
  func.func @transform_0(%arg0: i32) -> (i32, i32, i32) {
    %c0_i32 = arith.constant 0 : i32
    %c0_i32_0 = arith.constant 0 : i32
    %c0_i32_1 = arith.constant 0 : i32
    return %c0_i32, %arg0, %c0_i32_0 : i32, i32, i32
  }
  func.func @transform_1(%arg0: i32) -> (i32, i32, i32) {
    %c0_i32 = arith.constant 0 : i32
    %c0_i32_0 = arith.constant 0 : i32
    %c0_i32_1 = arith.constant 0 : i32
    return %c0_i32, %arg0, %c0_i32_0 : i32, i32, i32
  }
}

</mosaic_0001>

<llo_original>
// kernel: axis_angle_to_rotation_matrix.1
$region0: #{axis_angle_to_rotation_matrix.1}
  #allocation0 [shape = 'u32[]', space=smem, size = 0x4, offset = 0x4, fixed_abs, tag = 'smem constant byte address 0x4 - core index']
  #allocation1 [shape = 'u32[144,128]{1,0:T(1,128)}', space=vmem, size = 0x12000, scoped, tag = 'internal scratch']
  %s0 = inlined_call_operand.vmem [shape: f32[3,8,128], index: 0, kind: input, shape index: {}]
  %s1 = inlined_call_operand.vmem [shape: f32[9,8,128], index: 1, kind: output, shape index: {}]
  %s2 = sld [smem:[#allocation0]]
  $region14: #{axis_angle_to_rotation_matrix.1} parent=0
    _
  %s4 = ssub.s32 1, %s2
  %s5 = scalar_select 0, %s4, %s2
  // Predicated region
  $region2: #{axis_angle_to_rotation_matrix.1} parent=0 // pred_check
    _
  $region3: #{axis_angle_to_rotation_matrix.1} parent=0 // pred_check_branch
    %7 = sbr.rel (0) target = $region5
  $region4: #{axis_angle_to_rotation_matrix.1} parent=0 // pred_region
    _
  $region5: #{axis_angle_to_rotation_matrix.1} parent=0 // pred_fallthru
    _
  %v8 = vld [vmem:[%s0] sm:$0xff]
  %s9 = scalar_lea.vmem %s0, 8
  %v10 = vld [vmem:[%s9] sm:$0xff]
  %s11 = scalar_lea.vmem %s0, 16
  %v12 = vld [vmem:[%s11] sm:$0xff]
  %v13 = vmul.f32 %v8, %v8
  %v14 = vmul.f32 %v10, %v10
  %v15 = vadd.f32 %v13, %v14
  %v16 = vmul.f32 %v12, %v12
  %v17 = vadd.f32 %v15, %v16
  %v18 = vrsqrt.pop %v17
  %v19 = vmul.f32 %v17, %v18
  %vm20 = vcmp.eq.f32.partialorder %v17, inf
  %v21 = vsel %vm20, %v17, %v19
  %vm22 = vcmp.eq.f32.partialorder %v17, 0.0
  %v23 = vand.u32 %v17, 2147483648
  %v24 = vsel %vm22, %v23, %v21
  %v25 = vadd.f32 %v24, 1e-06
  %v26 = vrcp.pop %v25
  %v27 = vmul.f32 1.0, %v26
  %v28 = vmul.f32 %v8, %v27
  %v29 = vmul.f32 %v10, %v27
  %v30 = vmul.f32 %v12, %v27
  %v31 = vand.u32 2147483647, %v24
  %vm32 = vcmp.le.f32.partialorder %v31, 0.7853982
  %vm33 = vcmp.lt.s32.totalorder %v24, 0
  %v34 = vand.u32 %v24, 2139095040
  %v35 = vshrl.u32 %v34, 23
  %v36 = vsub.s32 %v35, 127
  %v37 = vand.u32 2147483647, %v24
  %v38 = vand.u32 %v37, 8388607
  %v39 = vor.u32 %v38, 8388608
  %v40 = vsub.s32 0, %v39
  %v41 = vadd.s32 %v36, 1
  %vm42 = vcmp.gt.s32.totalorder %v41, 0
  %v43 = vsel %vm42, %v41, 0
  %v44 = vshrl.u32 %v43, 5
  %v45 = vand.u32 %v43, 31
  %v46 = vsub.s32 32, %v45
  %v47 = vshrl.u32 683565275, %v46
  %v48 = vshll.u32 683565275, %v45
  %v49 = vshrl.u32 2475754826, %v46
  %v50 = vor.u32 %v48, %v49
  %v51 = vshll.u32 2475754826, %v45
  %v52 = vshrl.u32 2131351028, %v46
  %v53 = vor.u32 %v51, %v52
  %v54 = vshll.u32 2131351028, %v45
  %v55 = vshrl.u32 2102212464, %v46
  %v56 = vor.u32 %v54, %v55
  %v57 = vshll.u32 2102212464, %v45
  %v58 = vshrl.u32 920167782, %v46
  %v59 = vor.u32 %v57, %v58
  %v60 = vshll.u32 920167782, %v45
  %v61 = vshrl.u32 1326507024, %v46
  %v62 = vor.u32 %v60, %v61
  %vm63 = vcmp.lt.s32.totalorder %v44, 1
  %vm64 = vcmp.lt.s32.totalorder %v44, 2
  %vm65 = vcmp.lt.s32.totalorder %v44, 3
  %vm66 = vcmp.lt.s32.totalorder %v44, 4
  %v67 = vsel %vm63, %v47, %v50
  %v68 = vsel %vm66, %v56, 2102212464
  %v69 = vsel %vm65, %v53, %v68
  %v70 = vsel %vm64, %v67, %v69
  %v71 = vsel %vm63, %v50, %v53
  %v72 = vsel %vm66, %v59, 920167782
  %v73 = vsel %vm65, %v56, %v72
  %v74 = vsel %vm64, %v71, %v73
  %v75 = vsel %vm63, %v53, %v56
  %v76 = vsel %vm66, %v62, 1326507024
  %v77 = vsel %vm65, %v59, %v76
  %v78 = vsel %vm64, %v75, %v77
  %v79 = vshll.u32 %v39, 8
  %v80 = vmul.u32.u64.compose %v79, %v78
  %v81 = vextract.low.u32 %v80
  %v82 = vextract.high.u32 %v80
  %v83 = vmul.u32.u64.compose %v79, %v74
  %v84 = vextract.low.u32 %v83
  %v85 = vextract.high.u32 %v83
  %v86 = vmul.u32 %v79, %v70
  %v87 = vadd.s32 %v82, %v84
  %vm88 = vc.u32 %v82, %v84
  %v89 = vadd.s32 %v85, 1
  %v90 = vsel %vm88, %v89, %v85
  %v91 = vadd.s32 %v86, %v90
  %v92 = vadd.s32 %v91, 536870912
  %v93 = vshrl.u32 %v92, 30
  %v94 = vshll.u32 %v93, 30
  %v95 = vsub.s32 %v91, %v94
  %vm96 = vcmp.lt.s32.totalorder %v95, 0
  %v97 = vsub.s32 0, %v95
  %v98 = vsel %vm96, %v97, %v95
  %v99 = vclz %v98
  %v100 = vsub.s32 %v99, 2
  %vm101 = vcmp.gt.s32.totalorder 0, %v100
  %v102 = vsel %vm101, 0, %v100
  %v103 = vsub.s32 32, %v102
  %v104 = vshll.u32 %v95, %v102
  %v105 = vshrl.u32 %v87, %v103
  %v106 = vor.u32 %v104, %v105
  %v107 = vsub.s32 4294967266, %v102
  %v108 = vadd.s32 %v107, 127
  %v109 = vshll.u32 %v108, 23
  %v110 = vor.u32 4788187, %v109
  %v111 = vand.u32 2147483647, %v110
  %v113 = vcvt.s32.f32 %v106
  %v114 = vmul.f32 %v113, %v111
  %v115 = vxor.u32 %v114, 2147483648
  %v116 = vsel %vm33, %v115, %v114
  %v117 = vsub.s32 4, %v93
  %v118 = vsel %vm33, %v117, %v93
  %v119 = vsel %vm32, %v24, %v116
  %v120 = vsel %vm32, 0, %v118
  %v121 = vcosq.f32.pop %v119
  %v122 = vsinq.f32.pop %v119
  %vm123 = vweird.f32 %v24
  %v124 = vand.u32 %v120, 3
  %vm125 = vcmp.lt.s32.totalorder %v124, 2
  %vm126 = vcmp.eq.s32.totalorder %v124, 0
  %v127 = vxor.u32 %v122, 2147483648
  %v128 = vsel %vm126, %v121, %v127
  %vm129 = vcmp.eq.s32.totalorder %v124, 2
  %v130 = vxor.u32 %v121, 2147483648
  %v131 = vsel %vm129, %v130, %v122
  %v132 = vsel %vm125, %v128, %v131
  %v133 = vsel %vm123, nan, %v132
  %v134 = vand.u32 2147483647, %v24
  %vm135 = vcmp.le.f32.partialorder %v134, 0.7853982
  %vm136 = vcmp.lt.s32.totalorder %v24, 0
  %v137 = vand.u32 %v24, 2139095040
  %v138 = vshrl.u32 %v137, 23
  %v139 = vsub.s32 %v138, 127
  %v140 = vand.u32 2147483647, %v24
  %v141 = vand.u32 %v140, 8388607
  %v142 = vor.u32 %v141, 8388608
  %v143 = vsub.s32 0, %v142
  %v144 = vadd.s32 %v139, 1
  %vm145 = vcmp.gt.s32.totalorder %v144, 0
  %v146 = vsel %vm145, %v144, 0
  %v147 = vshrl.u32 %v146, 5
  %v148 = vand.u32 %v146, 31
  %v149 = vsub.s32 32, %v148
  %v150 = vshrl.u32 683565275, %v149
  %v151 = vshll.u32 683565275, %v148
  %v152 = vshrl.u32 2475754826, %v149
  %v153 = vor.u32 %v151, %v152
  %v154 = vshll.u32 2475754826, %v148
  %v155 = vshrl.u32 2131351028, %v149
  %v156 = vor.u32 %v154, %v155
  %v157 = vshll.u32 2131351028, %v148
  %v158 = vshrl.u32 2102212464, %v149
  %v159 = vor.u32 %v157, %v158
  %v160 = vshll.u32 2102212464, %v148
  %v161 = vshrl.u32 920167782, %v149
  %v162 = vor.u32 %v160, %v161
  %v163 = vshll.u32 920167782, %v148
  %v164 = vshrl.u32 1326507024, %v149
  %v165 = vor.u32 %v163, %v164
  %vm166 = vcmp.lt.s32.totalorder %v147, 1
  %vm167 = vcmp.lt.s32.totalorder %v147, 2
  %vm168 = vcmp.lt.s32.totalorder %v147, 3
  %vm169 = vcmp.lt.s32.totalorder %v147, 4
  %v170 = vsel %vm166, %v150, %v153
  %v171 = vsel %vm169, %v159, 2102212464
  %v172 = vsel %vm168, %v156, %v171
  %v173 = vsel %vm167, %v170, %v172
  %v174 = vsel %vm166, %v153, %v156
  %v175 = vsel %vm169, %v162, 920167782
  %v176 = vsel %vm168, %v159, %v175
  %v177 = vsel %vm167, %v174, %v176
  %v178 = vsel %vm166, %v156, %v159
  %v179 = vsel %vm169, %v165, 1326507024
  %v180 = vsel %vm168, %v162, %v179
  %v181 = vsel %vm167, %v178, %v180
  %v182 = vshll.u32 %v142, 8
  %v183 = vmul.u32.u64.compose %v182, %v181
  %v184 = vextract.low.u32 %v183
  %v185 = vextract.high.u32 %v183
  %v186 = vmul.u32.u64.compose %v182, %v177
  %v187 = vextract.low.u32 %v186
  %v188 = vextract.high.u32 %v186
  %v189 = vmul.u32 %v182, %v173
  %v190 = vadd.s32 %v185, %v187
  %vm191 = vc.u32 %v185, %v187
  %v192 = vadd.s32 %v188, 1
  %v193 = vsel %vm191, %v192, %v188
  %v194 = vadd.s32 %v189, %v193
  %v195 = vadd.s32 %v194, 536870912
  %v196 = vshrl.u32 %v195, 30
  %v197 = vshll.u32 %v196, 30
  %v198 = vsub.s32 %v194, %v197
  %vm199 = vcmp.lt.s32.totalorder %v198, 0
  %v200 = vsub.s32 0, %v198
  %v201 = vsel %vm199, %v200, %v198
  %v202 = vclz %v201
  %v203 = vsub.s32 %v202, 2
  %vm204 = vcmp.gt.s32.totalorder 0, %v203
  %v205 = vsel %vm204, 0, %v203
  %v206 = vsub.s32 32, %v205
  %v207 = vshll.u32 %v198, %v205
  %v208 = vshrl.u32 %v190, %v206
  %v209 = vor.u32 %v207, %v208
  %v210 = vsub.s32 4294967266, %v205
  %v211 = vadd.s32 %v210, 127
  %v212 = vshll.u32 %v211, 23
  %v213 = vor.u32 4788187, %v212
  %v214 = vand.u32 2147483647, %v213
  %v216 = vcvt.s32.f32 %v209
  %v217 = vmul.f32 %v216, %v214
  %v218 = vxor.u32 %v217, 2147483648
  %v219 = vsel %vm136, %v218, %v217
  %v220 = vsub.s32 4, %v196
  %v221 = vsel %vm136, %v220, %v196
  %v222 = vsel %vm135, %v24, %v219
  %v223 = vsel %vm135, 0, %v221
  %v224 = vcosq.f32.pop %v222
  %v225 = vsinq.f32.pop %v222
  %vm226 = vweird.f32 %v24
  %v227 = vadd.s32 %v223, 3
  %v228 = vand.u32 %v227, 3
  %vm229 = vcmp.lt.s32.totalorder %v228, 2
  %vm230 = vcmp.eq.s32.totalorder %v228, 0
  %v231 = vxor.u32 %v225, 2147483648
  %v232 = vsel %vm230, %v224, %v231
  %vm233 = vcmp.eq.s32.totalorder %v228, 2
  %v234 = vxor.u32 %v224, 2147483648
  %v235 = vsel %vm233, %v234, %v225
  %v236 = vsel %vm229, %v232, %v235
  %v237 = vsel %vm226, nan, %v236
  %v238 = vsub.f32 1.0, %v133
  %v239 = vmul.f32 %v28, %v29
  %v240 = vmul.f32 %v239, %v238
  %v241 = vmul.f32 %v28, %v30
  %v242 = vmul.f32 %v241, %v238
  %v243 = vmul.f32 %v29, %v30
  %v244 = vmul.f32 %v243, %v238
  %vm245 = vcmp.gt.f32.partialorder %v17, 1e-06
  %v246 = vmul.f32 %v28, %v28
  %v247 = vmul.f32 %v246, %v238
  %v248 = vadd.f32 %v133, %v247
  %v249 = vsel %vm245, %v248, 1.0
  %250 = vst [vmem:[%s1] sm:$0xff] %v249
  %v251 = vmul.f32 %v30, %v237
  %v252 = vsub.f32 %v240, %v251
  %v253 = vsub.f32 0.0, %v12
  %v254 = vsel %vm245, %v252, %v253
  %s255 = scalar_lea.vmem %s1, 8
  %256 = vst [vmem:[%s255] sm:$0xff] %v254
  %v257 = vmul.f32 %v29, %v237
  %v258 = vadd.f32 %v242, %v257
  %v259 = vsel %vm245, %v258, %v10
  %s260 = scalar_lea.vmem %s1, 16
  %261 = vst [vmem:[%s260] sm:$0xff] %v259
  %v262 = vadd.f32 %v240, %v251
  %v263 = vsel %vm245, %v262, %v12
  %s264 = scalar_lea.vmem %s1, 24
  %265 = vst [vmem:[%s264] sm:$0xff] %v263
  %v266 = vmul.f32 %v29, %v29
  %v267 = vmul.f32 %v266, %v238
  %v268 = vadd.f32 %v133, %v267
  %v269 = vsel %vm245, %v268, 1.0
  %s270 = scalar_lea.vmem %s1, 32
  %271 = vst [vmem:[%s270] sm:$0xff] %v269
  %v272 = vmul.f32 %v28, %v237
  %v273 = vsub.f32 %v244, %v272
  %v274 = vsub.f32 0.0, %v8
  %v275 = vsel %vm245, %v273, %v274
  %s276 = scalar_lea.vmem %s1, 40
  %277 = vst [vmem:[%s276] sm:$0xff] %v275
  %v278 = vsub.f32 %v242, %v257
  %v279 = vsub.f32 0.0, %v10
  %v280 = vsel %vm245, %v278, %v279
  %s281 = scalar_lea.vmem %s1, 48
  %282 = vst [vmem:[%s281] sm:$0xff] %v280
  %v283 = vadd.f32 %v244, %v272
  %v284 = vsel %vm245, %v283, %v8
  %s285 = scalar_lea.vmem %s1, 56
  %286 = vst [vmem:[%s285] sm:$0xff] %v284
  %v287 = vmul.f32 %v30, %v30
  %v288 = vmul.f32 %v287, %v238
  %v289 = vadd.f32 %v133, %v288
  %v290 = vsel %vm245, %v289, 1.0
  %s291 = scalar_lea.vmem %s1, 64
  %292 = vst [vmem:[%s291] sm:$0xff] %v290
  // Predicated region
  $region6: #{axis_angle_to_rotation_matrix.1} parent=0 // pred_check
    _
  $region7: #{axis_angle_to_rotation_matrix.1} parent=0 // pred_check_branch
    %294 = sbr.rel (0) target = $region9
  $region8: #{axis_angle_to_rotation_matrix.1} parent=0 // pred_region
    _
  $region9: #{axis_angle_to_rotation_matrix.1} parent=0 // pred_fallthru
    _
  // Predicated region
  $region10: #{axis_angle_to_rotation_matrix.1} parent=0 // pred_check
    _
  $region11: #{axis_angle_to_rotation_matrix.1} parent=0 // pred_check_branch
    %296 = sbr.rel (0) target = $region13
  $region12: #{axis_angle_to_rotation_matrix.1} parent=0 // pred_region
    _
  $region13: #{axis_angle_to_rotation_matrix.1} parent=0 // pred_fallthru
    _

</llo_original>
